<compile_context>
chip_gen: v6e
topology: v6e:2x2x1
jax: 0.10.0
libtpu: 0.0.40
codegen_flags: <defaults>
</compile_context>

<pallas_src>
import functools

import jax
import jax.numpy as jnp
from jax.experimental import pallas as pl
from jax.experimental.pallas import tpu as pltpu

ARCFACE_SCALE = 30.0   # standard ArcFace scale s
BN_EPS = 1e-5
L2_EPS = 1e-12


def _round_up(x, m):
    return ((x + m - 1) // m) * m


def _pick_tile_h(H, W, k_pad, cout_pad, vmem_budget_bytes=6 << 20):
    """Largest divisor of H whose per-step working set fits a conservative budget.

    Per-step bytes ~ 2x double-buffered bf16 input tile + f32 activation tile.
    Budget kept well under the scoped VMEM default on all generations
    (v5e 16 MiB, v6e 32 MiB, v7x 32 MiB of only 64 MiB physical).
    """
    best = 1
    for th in range(1, H + 1):
        if H % th:
            continue
        per_step = 2 * th * W * k_pad * 2 + th * W * cout_pad * 4
        if per_step <= vmem_budget_bytes:
            best = th
    return best


# -------------------- fused conv3x3 + ReLU + GAP + neck + ArcFace --------------------
def _fused_forward_kernel(x_ref, w_ref, b_ref, nw_ref, nb_ref, aw_ref,
                          o_ref, pooled_acc):
    """Grid step (b, t): one K-packed conv matmul + ReLU + pooled-sum accumulate.
    On the last row-tile of each image: fused neck + L2-normalize + ArcFace head."""
    t = pl.program_id(1)

    @pl.when(t == 0)
    def _init():
        pooled_acc[...] = jnp.zeros(pooled_acc.shape, pooled_acc.dtype)

    # Single MXU contraction over K = 9*Cin (padded): (L, K_pad) @ (K_pad, Cout_pad).
    y = jnp.dot(x_ref[0, 0, :, :], w_ref[...],
                preferred_element_type=jnp.float32)
    y = jnp.maximum(y + b_ref[...], 0.0)                       # bias + ReLU

    # Spatial-sum accumulate into a lane-dense f32 VMEM scratch (not the output).
    pooled_acc[...] += jnp.sum(y, axis=0, keepdims=True)       # (1, Cout_pad)

    @pl.when(t == pl.num_programs(1) - 1)
    def _finalize():
        # 1/(H*W) is pre-folded into nw_ref, so the spatial SUM feeds the neck.
        pooled = pooled_acc[...]                                # (1, Cout_pad) f32
        emb = jnp.dot(pooled, nw_ref[...],
                      preferred_element_type=jnp.float32) + nb_ref[...]   # (1, E_pad)
        # dropout rate == 0.0 -> identity
        # ArcFace inference path (labels=None): s * cos(theta); class weights are
        # pre-L2-normalized, so only the embedding needs normalizing here (EUP rsqrt).
        inv_norm = jax.lax.rsqrt(
            jnp.maximum(jnp.sum(emb * emb, axis=1, keepdims=True),
                        L2_EPS * L2_EPS))
        logits = ARCFACE_SCALE * jnp.dot(emb * inv_norm, aw_ref[...],
                                         preferred_element_type=jnp.float32)
        o_ref[...] = logits[None, :, :]                         # (1, 1, NC_pad)


def monkey_recognition_forward(x, params, *, num_classes, tile_h=None):
    """x: (B, 3, H, W) f32 NCHW (PyTorch layout). Returns (B, num_classes) f32 logits."""
    B, Cin, H, W = x.shape
    w_packed = params["conv_w_packed"]                          # (K_pad, Cout_pad) bf16
    K_pad, Cout_pad = w_packed.shape
    K = 9 * Cin
    E_pad = params["neck_w"].shape[1]
    NC_pad = params["arc_w"].shape[1]

    if tile_h is None:
        tile_h = _pick_tile_h(H, W, K_pad, Cout_pad)
    elif H % tile_h != 0:
        raise ValueError(f"tile_h={tile_h} must divide H={H}")
    n_t = H // tile_h
    L = tile_h * W                                              # output positions / tile

    # Channel-only im2col (K = 9*Cin, zero-padded border). With Cin=3 the duplication
    # is trivial and it lets the kernel issue ONE K-deep MXU contraction per tile
    # (no halo stacking, no in-kernel pad-column masking).
    xb = jnp.transpose(x, (0, 2, 3, 1)).astype(jnp.bfloat16)    # (B, H, W, Cin)
    xp = jnp.pad(xb, ((0, 0), (1, 1), (1, 1), (0, 0)))          # (B, H+2, W+2, Cin)
    patches = [xp[:, kh:kh + H, kw:kw + W, :]
               for kh in range(3) for kw in range(3)]
    xc = jnp.concatenate(patches, axis=-1)                      # (B, H, W, 9*Cin)
    if K_pad > K:
        xc = jnp.pad(xc, ((0, 0), (0, 0), (0, 0), (0, K_pad - K)))
    xc = xc.reshape(B, n_t, L, K_pad)                           # row tiles, tap-packed K

    out = pl.pallas_call(
        _fused_forward_kernel,
        grid=(B, n_t),
        out_shape=jax.ShapeDtypeStruct((B, 1, NC_pad), jnp.float32),
        in_specs=[
            pl.BlockSpec((1, 1, L, K_pad), lambda b, t: (b, t, 0, 0)),
            pl.BlockSpec((K_pad, Cout_pad), lambda b, t: (0, 0)),
            pl.BlockSpec((1, Cout_pad), lambda b, t: (0, 0)),
            pl.BlockSpec((Cout_pad, E_pad), lambda b, t: (0, 0)),
            pl.BlockSpec((1, E_pad), lambda b, t: (0, 0)),
            pl.BlockSpec((E_pad, NC_pad), lambda b, t: (0, 0)),
        ],
        out_specs=pl.BlockSpec((1, 1, NC_pad), lambda b, t: (b, 0, 0)),
        scratch_shapes=[pltpu.VMEM((1, Cout_pad), jnp.float32)],
        compiler_params=pltpu.CompilerParams(
            dimension_semantics=("parallel", "arbitrary")),
    )(xc, w_packed, params["conv_b"], params["neck_w"],
      params["neck_b"], params["arc_w"])

    return out.reshape(B, NC_pad)[:, :num_classes]


# ----------------------------------- parameter prep -----------------------------------
def init_params(key, c_in=3, c_feat=64, emb=32, num_classes=10):
    """Raw parameters in PyTorch layout."""
    ks = jax.random.split(key, 8)
    return {
        "conv_w": 0.1 * jax.random.normal(ks[0], (c_feat, c_in, 3, 3), jnp.float32),
        "conv_b": 0.1 * jax.random.normal(ks[1], (c_feat,), jnp.float32),
        "neck_w": 0.1 * jax.random.normal(ks[2], (emb, c_feat), jnp.float32),
        "neck_b": 0.1 * jax.random.normal(ks[3], (emb,), jnp.float32),
        "bn_gamma": 1.0 + 0.05 * jax.random.normal(ks[4], (emb,), jnp.float32),
        "bn_beta": 0.05 * jax.random.normal(ks[5], (emb,), jnp.float32),
        "bn_rmean": 0.05 * jax.random.normal(ks[6], (emb,), jnp.float32),
        "bn_rvar": jnp.abs(1.0 + 0.05 * jax.random.normal(ks[7], (emb,), jnp.float32)),
        "arc_w": 0.1 * jax.random.normal(jax.random.fold_in(key, 99),
                                         (num_classes, emb), jnp.float32),
    }


def prepare_params(p, *, input_hw):
    """One-time weight folding / re-layout (done at load time, not per forward)."""
    c_feat, c_in = p["conv_w"].shape[0], p["conv_w"].shape[1]
    emb = p["neck_w"].shape[0]
    nc = p["arc_w"].shape[0]
    H, W = input_hw

    K = 9 * c_in
    K_pad = _round_up(K, 32)            # merged conv contraction depth
    Cout_pad = _round_up(c_feat, 128)   # lane-dense feature channels
    E_pad = _round_up(emb, 128)
    NC_pad = _round_up(nc, 128)

    # Conv weights -> K-packed (9*Cin, Cout): row index f = (kh*3+kw)*Cin + cin,
    # matching the wrapper im2col order. Zero-pad to (K_pad, Cout_pad), bf16 for MXU.
    w = jnp.transpose(p["conv_w"], (2, 3, 1, 0)).reshape(K, c_feat)
    w = jnp.pad(w, ((0, K_pad - K), (0, Cout_pad - c_feat)))
    conv_b = jnp.pad(p["conv_b"], (0, Cout_pad - c_feat)).reshape(1, Cout_pad)

    # Fold eval-mode BatchNorm1d AND the global-average-pool 1/(H*W) into the neck
    # Linear: the kernel accumulates a spatial SUM, the weight carries the mean scale.
    inv_std = 1.0 / jnp.sqrt(p["bn_rvar"] + BN_EPS)
    scale = p["bn_gamma"] * inv_std                                   # (E,)
    neck_w = (p["neck_w"] * scale[:, None]).T * (1.0 / float(H * W))  # (C, E)
    neck_b = (p["neck_b"] - p["bn_rmean"]) * scale + p["bn_beta"]     # (E,)
    neck_w = jnp.pad(neck_w, ((0, Cout_pad - c_feat), (0, E_pad - emb)))
    neck_b = jnp.pad(neck_b, (0, E_pad - emb)).reshape(1, E_pad)

    # Pre-L2-normalize ArcFace class weights, transpose to (E, NC), pad lane-dense.
    arc_norm = jnp.sqrt(jnp.sum(p["arc_w"] ** 2, axis=1, keepdims=True))
    arc_w = (p["arc_w"] / jnp.maximum(arc_norm, L2_EPS)).T            # (E, NC)
    arc_w = jnp.pad(arc_w, ((0, E_pad - emb), (0, NC_pad - nc)))

    return {
        "conv_w_packed": w.astype(jnp.bfloat16),
        "conv_b": conv_b.astype(jnp.float32),
        "neck_w": neck_w.astype(jnp.float32),
        "neck_b": neck_b.astype(jnp.float32),
        "arc_w": arc_w.astype(jnp.float32),
    }


# --------------------------------------- reference -------------------------------------
def reference_forward(x, raw):
    """Pure-JAX reference of the same math (bf16-rounded conv inputs/weights)."""
    xb = x.astype(jnp.bfloat16).astype(jnp.float32)
    wb = raw["conv_w"].astype(jnp.bfloat16).astype(jnp.float32)
    feat = jax.lax.conv_general_dilated(
        xb, wb, window_strides=(1, 1), padding=((1, 1), (1, 1)),
        dimension_numbers=("NCHW", "OIHW", "NCHW"))
    feat = jnp.maximum(feat + raw["conv_b"][None, :, None, None], 0.0)
    pooled = jnp.mean(feat, axis=(2, 3))                              # GAP + flatten
    emb = pooled @ raw["neck_w"].T + raw["neck_b"]
    emb = ((emb - raw["bn_rmean"]) / jnp.sqrt(raw["bn_rvar"] + BN_EPS)
           * raw["bn_gamma"] + raw["bn_beta"])
    emb_n = emb / jnp.maximum(
        jnp.sqrt(jnp.sum(emb * emb, axis=1, keepdims=True)), L2_EPS)
    w_n = raw["arc_w"] / jnp.maximum(
        jnp.sqrt(jnp.sum(raw["arc_w"] ** 2, axis=1, keepdims=True)), L2_EPS)
    return ARCFACE_SCALE * emb_n @ w_n.T


if __name__ == "__main__":
    key = jax.random.PRNGKey(0)
    kx, kp = jax.random.split(key)

    B, C_IN, H, W = 2, 3, 16, 16                 # small synthetic RGB batch (NCHW)
    NUM_CLASSES = 10
    x = jax.random.normal(kx, (B, C_IN, H, W), jnp.float32)
    raw = init_params(kp, c_in=C_IN, c_feat=64, emb=32, num_classes=NUM_CLASSES)
    params = prepare_params(raw, input_hw=(H, W))   # one-time folding / layout

    fwd = jax.jit(functools.partial(monkey_recognition_forward,
                                    num_classes=NUM_CLASSES))
    logits = fwd(x, params)
    jax.block_until_ready(logits)

    assert logits.shape == (B, NUM_CLASSES) and logits.dtype == jnp.float32
    ref = reference_forward(x, raw)
    assert jnp.allclose(logits, ref, atol=5e-2, rtol=5e-2), "mismatch vs JAX reference"
    print("KERNEL_OK")
</pallas_src>

<mosaic_0001>
module attributes {stable_mosaic.version = 11 : i64} {
  func.func @_fused_forward_kernel(%arg0: i32, %arg1: i32, %arg2: memref<1x1x256x32xbf16, #tpu.memory_space<vmem>>, %arg3: memref<32x128xbf16, #tpu.memory_space<vmem>>, %arg4: memref<1x128xf32, #tpu.memory_space<vmem>>, %arg5: memref<128x128xf32, #tpu.memory_space<vmem>>, %arg6: memref<1x128xf32, #tpu.memory_space<vmem>>, %arg7: memref<128x128xf32, #tpu.memory_space<vmem>>, %arg8: memref<1x1x128xf32, #tpu.memory_space<vmem>>, %arg9: memref<1x128xf32, #tpu.memory_space<vmem>>) attributes {dimension_semantics = [#tpu.dimension_semantics<parallel>, #tpu.dimension_semantics<arbitrary>], iteration_bounds = array<i64: 2, 1>, scalar_prefetch = 0 : i64, scratch_operands = 1 : i64, tpu.core_type = #tpu.core_type<tc>, window_params = [{transform_indices = @transform_0, window_bounds = array<i64: 1, 1, 256, 32>}, {pipeline_mode = #tpu.pipeline_mode<synchronous>, transform_indices = @transform_1, window_bounds = array<i64: 32, 128>}, {pipeline_mode = #tpu.pipeline_mode<synchronous>, transform_indices = @transform_2, window_bounds = array<i64: 1, 128>}, {pipeline_mode = #tpu.pipeline_mode<synchronous>, transform_indices = @transform_3, window_bounds = array<i64: 128, 128>}, {pipeline_mode = #tpu.pipeline_mode<synchronous>, transform_indices = @transform_4, window_bounds = array<i64: 1, 128>}, {pipeline_mode = #tpu.pipeline_mode<synchronous>, transform_indices = @transform_5, window_bounds = array<i64: 128, 128>}, {transform_indices = @transform_6, window_bounds = array<i64: 1, 1, 128>}]} {
    %c0_i32 = arith.constant 0 : i32
    %0 = arith.cmpi eq, %arg1, %c0_i32 : i32
    %1 = arith.extui %0 : i1 to i32
    %c0_i32_0 = arith.constant 0 : i32
    %2 = arith.cmpi ne, %1, %c0_i32_0 : i32
    scf.if %2 {
      %cst_16 = arith.constant 0.000000e+00 : f32
      %20 = vector.broadcast %cst_16 : f32 to vector<1x128xf32>
      %c0_17 = arith.constant 0 : index
      %c0_18 = arith.constant 0 : index
      %21 = vector.load %arg9[%c0_17, %c0_18] : memref<1x128xf32, #tpu.memory_space<vmem>>, vector<1x128xf32>
      tpu.vector_store %arg9[%c0_17, %c0_18], %20 {strides = array<i32>} : memref<1x128xf32, #tpu.memory_space<vmem>>, vector<1x128xf32>,
    } else {
    }
    %c0 = arith.constant 0 : index
    %c0_1 = arith.constant 0 : index
    %c0_2 = arith.constant 0 : index
    %c0_3 = arith.constant 0 : index
    %3 = vector.load %arg2[%c0, %c0_1, %c0_2, %c0_3] : memref<1x1x256x32xbf16, #tpu.memory_space<vmem>>, vector<1x1x256x32xbf16>
    %4 = vector.shape_cast %3 : vector<1x1x256x32xbf16> to vector<256x32xbf16>
    %c0_4 = arith.constant 0 : index
    %c0_5 = arith.constant 0 : index
    %5 = vector.load %arg3[%c0_4, %c0_5] : memref<32x128xbf16, #tpu.memory_space<vmem>>, vector<32x128xbf16>
    %cst = arith.constant dense<0.000000e+00> : vector<256x128xf32>
    %6 = tpu.matmul %4, %5, %cst {dimension_numbers = #tpu.dot_dimension_numbers<[1], [0], [0], [1], [0, 0, 1, 1], [], []>} : vector<256x32xbf16>, vector<32x128xbf16>, vector<256x128xf32> -> vector<256x128xf32>
    %c0_6 = arith.constant 0 : index
    %c0_7 = arith.constant 0 : index
    %7 = vector.load %arg4[%c0_6, %c0_7] : memref<1x128xf32, #tpu.memory_space<vmem>>, vector<1x128xf32>
    %8 = vector.broadcast %7 : vector<1x128xf32> to vector<256x128xf32>
    %9 = arith.addf %6, %8 : vector<256x128xf32>
    %cst_8 = arith.constant 0.000000e+00 : f32
    %10 = vector.broadcast %cst_8 : f32 to vector<256x128xf32>
    %11 = arith.maximumf %9, %10 : vector<256x128xf32>
    %c0_9 = arith.constant 0 : index
    %c0_10 = arith.constant 0 : index
    %12 = vector.load %arg9[%c0_9, %c0_10] : memref<1x128xf32, #tpu.memory_space<vmem>>, vector<1x128xf32>
    %cst_11 = arith.constant dense<0.000000e+00> : vector<128xf32>
    %13 = vector.multi_reduction <add>, %11, %cst_11 [0] : vector<256x128xf32> to vector<128xf32>
    %14 = vector.shape_cast %13 : vector<128xf32> to vector<1x128xf32>
    %15 = arith.addf %12, %14 : vector<1x128xf32>
    %c0_12 = arith.constant 0 : index
    %c0_13 = arith.constant 0 : index
    %16 = vector.load %arg9[%c0_12, %c0_13] : memref<1x128xf32, #tpu.memory_space<vmem>>, vector<1x128xf32>
    tpu.vector_store %arg9[%c0_12, %c0_13], %15 {strides = array<i32>} : memref<1x128xf32, #tpu.memory_space<vmem>>, vector<1x128xf32>,
    %c0_i32_14 = arith.constant 0 : i32
    %17 = arith.cmpi eq, %arg1, %c0_i32_14 : i32
    %18 = arith.extui %17 : i1 to i32
    %c0_i32_15 = arith.constant 0 : i32
    %19 = arith.cmpi ne, %18, %c0_i32_15 : i32
    scf.if %19 {
      %c0_16 = arith.constant 0 : index
      %c0_17 = arith.constant 0 : index
      %20 = vector.load %arg9[%c0_16, %c0_17] : memref<1x128xf32, #tpu.memory_space<vmem>>, vector<1x128xf32>
      %c0_18 = arith.constant 0 : index
      %c0_19 = arith.constant 0 : index
      %21 = vector.load %arg5[%c0_18, %c0_19] : memref<128x128xf32, #tpu.memory_space<vmem>>, vector<128x128xf32>
      %cst_20 = arith.constant dense<0.000000e+00> : vector<1x128xf32>
      %22 = tpu.matmul %20, %21, %cst_20 {dimension_numbers = #tpu.dot_dimension_numbers<[1], [0], [0], [1], [0, 0, 1, 1], [], []>} : vector<1x128xf32>, vector<128x128xf32>, vector<1x128xf32> -> vector<1x128xf32>
      %c0_21 = arith.constant 0 : index
      %c0_22 = arith.constant 0 : index
      %23 = vector.load %arg6[%c0_21, %c0_22] : memref<1x128xf32, #tpu.memory_space<vmem>>, vector<1x128xf32>
      %24 = arith.addf %22, %23 : vector<1x128xf32>
      %25 = arith.mulf %24, %24 : vector<1x128xf32>
      %cst_23 = arith.constant dense<0.000000e+00> : vector<1xf32>
      %26 = vector.multi_reduction <add>, %25, %cst_23 [1] : vector<1x128xf32> to vector<1xf32>
      %27 = vector.shape_cast %26 : vector<1xf32> to vector<1x1xf32>
      %cst_24 = arith.constant 1.000000e-24 : f32
      %28 = vector.broadcast %cst_24 : f32 to vector<1x1xf32>
      %29 = arith.maximumf %27, %28 : vector<1x1xf32>
      %30 = math.rsqrt %29 : vector<1x1xf32>
      %31 = vector.broadcast %30 : vector<1x1xf32> to vector<1x128xf32>
      %32 = arith.mulf %24, %31 : vector<1x128xf32>
      %c0_25 = arith.constant 0 : index
      %c0_26 = arith.constant 0 : index
      %33 = vector.load %arg7[%c0_25, %c0_26] : memref<128x128xf32, #tpu.memory_space<vmem>>, vector<128x128xf32>
      %cst_27 = arith.constant dense<0.000000e+00> : vector<1x128xf32>
      %34 = tpu.matmul %32, %33, %cst_27 {dimension_numbers = #tpu.dot_dimension_numbers<[1], [0], [0], [1], [0, 0, 1, 1], [], []>} : vector<1x128xf32>, vector<128x128xf32>, vector<1x128xf32> -> vector<1x128xf32>
      %cst_28 = arith.constant 3.000000e+01 : f32
      %35 = vector.broadcast %cst_28 : f32 to vector<1x128xf32>
      %36 = arith.mulf %35, %34 : vector<1x128xf32>
      %37 = vector.shape_cast %36 : vector<1x128xf32> to vector<1x1x128xf32>
      %c0_29 = arith.constant 0 : index
      %c0_30 = arith.constant 0 : index
      %c0_31 = arith.constant 0 : index
      %38 = vector.load %arg8[%c0_29, %c0_30, %c0_31] : memref<1x1x128xf32, #tpu.memory_space<vmem>>, vector<1x1x128xf32>
      tpu.vector_store %arg8[%c0_29, %c0_30, %c0_31], %37 {strides = array<i32>} : memref<1x1x128xf32, #tpu.memory_space<vmem>>, vector<1x1x128xf32>,
    } else {
    }
    return
  }
  func.func @transform_0(%arg0: i32, %arg1: i32) -> (i32, i32, i32, i32) {
    %c0_i32 = arith.constant 0 : i32
    %c0_i32_0 = arith.constant 0 : i32
    %c0_i32_1 = arith.constant 0 : i32
    return %arg0, %arg1, %c0_i32, %c0_i32_0 : i32, i32, i32, i32
  }
  func.func @transform_1(%arg0: i32, %arg1: i32) -> (i32, i32) {
    %c0_i32 = arith.constant 0 : i32
    %c0_i32_0 = arith.constant 0 : i32
    %c0_i32_1 = arith.constant 0 : i32
    return %c0_i32, %c0_i32_0 : i32, i32
  }
  func.func @transform_2(%arg0: i32, %arg1: i32) -> (i32, i32) {
    %c0_i32 = arith.constant 0 : i32
    %c0_i32_0 = arith.constant 0 : i32
    %c0_i32_1 = arith.constant 0 : i32
    return %c0_i32, %c0_i32_0 : i32, i32
  }
  func.func @transform_3(%arg0: i32, %arg1: i32) -> (i32, i32) {
    %c0_i32 = arith.constant 0 : i32
    %c0_i32_0 = arith.constant 0 : i32
    %c0_i32_1 = arith.constant 0 : i32
    return %c0_i32, %c0_i32_0 : i32, i32
  }
  func.func @transform_4(%arg0: i32, %arg1: i32) -> (i32, i32) {
    %c0_i32 = arith.constant 0 : i32
    %c0_i32_0 = arith.constant 0 : i32
    %c0_i32_1 = arith.constant 0 : i32
    return %c0_i32, %c0_i32_0 : i32, i32
  }
  func.func @transform_5(%arg0: i32, %arg1: i32) -> (i32, i32) {
    %c0_i32 = arith.constant 0 : i32
    %c0_i32_0 = arith.constant 0 : i32
    %c0_i32_1 = arith.constant 0 : i32
    return %c0_i32, %c0_i32_0 : i32, i32
  }
  func.func @transform_6(%arg0: i32, %arg1: i32) -> (i32, i32, i32) {
    %c0_i32 = arith.constant 0 : i32
    %c0_i32_0 = arith.constant 0 : i32
    %c0_i32_1 = arith.constant 0 : i32
    return %arg0, %c0_i32, %c0_i32_0 : i32, i32, i32
  }
}

</mosaic_0001>

<llo_original>
// kernel: monkey_recognition_forward.1
$region0: #{monkey_recognition_forward.1}
  #allocation0 [shape = 'u32[]', space=smem, size = 0x4, offset = 0x4, fixed_abs, tag = 'smem constant byte address 0x4 - core index']
  #allocation1 [shape = 'u32[144,128]{1,0:T(1,128)}', space=vmem, size = 0x12000, scoped, tag = 'internal scratch']
  #allocation2 [shape = 'f32[1,128]{1,0:T(1,128)}', space=vmem, size = 0x200, scoped, tag = 'scratch operand']
  %s0 = inlined_call_operand.vmem [shape: bf16[2,1,256,32], index: 0, kind: input, shape index: {}]
  %s1 = inlined_call_operand.vmem [shape: bf16[32,128], index: 1, kind: input, shape index: {}]
  %s2 = inlined_call_operand.vmem [shape: f32[1,128], index: 2, kind: input, shape index: {}]
  %s3 = inlined_call_operand.vmem [shape: f32[128,128], index: 3, kind: input, shape index: {}]
  %s4 = inlined_call_operand.vmem [shape: f32[1,128], index: 4, kind: input, shape index: {}]
  %s5 = inlined_call_operand.vmem [shape: f32[128,128], index: 5, kind: input, shape index: {}]
  %s6 = inlined_call_operand.hbm [shape: f32[2,1,128], index: 6, kind: output, shape index: {}]
  %s7 = sld [smem:[#allocation0]]
  $region65: #{monkey_recognition_forward.1} parent=0
    _
  %s9 = ssub.s32 1, %s7
  %s10 = scalar_select 0, %s9, %s7
  $region1: #{monkey_recognition_forward.1} parent=0
    #allocation3 [shape = 'u8[1024]{0}', space=vmem, size = 0x400, scoped, tag = 'output window, operand 0']
    #allocation4 [shape = 's32[2]{0}', space=sflag, size = 0x8, scoped, tag = 'scoped memory for monkey_recognition_forward.1']
    %11 = vsyncpa [#allocation4], 0
    %s12 = scalar_lea.sflag [#allocation4], 1
    %13 = vsyncpa %s12, 0
    loop: start=0, step=1, limit=4
    $region2: #{monkey_recognition_forward.1} parent=1 // loop_pre_header
      _
    $region3: #{monkey_recognition_forward.1} parent=1 // loop_header
      %s15 = sphi 0, %s19
      %p16 = scmp.ge.s32.totalorder %s15, 4
      %s22 = sphi 0, %s34
      %s23 = sphi 0, %s30
      %s24 = sphi 0, %s22
      %s25 = sphi 0, %s23
      %s26 = sphi 0, %s24
      %s27 = sphi 0, %s25
      %s39 = sphi 0, %s41
      %s42 = sphi 0, %s39
      %s43 = sphi 0, %s42
      %s59 = sphi 0, %s43
      %s63 = sphi 0, %s63
      %s65 = sphi 0, %s63
      %s66 = sphi 0, %s65
      %s80 = sphi 0, %s66
      %s84 = sphi 0, %s84
      %s86 = sphi 0, %s84
      %s87 = sphi 0, %s86
      %s101 = sphi 0, %s87
      %s105 = sphi 0, %s105
      %s107 = sphi 0, %s105
      %s108 = sphi 0, %s107
      %s122 = sphi 0, %s108
      %s126 = sphi 0, %s126
      %s128 = sphi 0, %s126
      %s129 = sphi 0, %s128
      %s143 = sphi 0, %s129
      %s147 = sphi 0, %s147
      %s149 = sphi 0, %s147
      %s150 = sphi 0, %s149
      %s164 = sphi 0, %s150
      %s170 = sphi 0, %s172
      %s173 = sphi 0, %s170
      %s174 = sphi 0, %s173
      %s190 = sphi 0, %s174
    $region4: #{monkey_recognition_forward.1} parent=1 // loop_header_branch
      %18 = sbr.rel (%p16) target = $region8
    $region5: #{monkey_recognition_forward.1} parent=1 // loop_body
      %s20 = ssub.s32 %s15, 1
      %s21 = ssub.s32 %s15, 2
      %s28 = sadd.s32 1, %s23
      %p29 = scmp.ge.s32.totalorder %s28, 1
      %s30 = scalar_select %p29, 0, %s28
      %s31 = sadd.s32 1, %s22
      %s32 = scalar_select %p29, %s31, %s22
      %p33 = scmp.ge.s32.totalorder %s32, 2
      %s34 = scalar_select %p33, 0, %s32
      %s35 = ssub.s32 %s22, %s34
      %s36 = ssub.s32 %s23, %s30
      %s37 = sor.u32 %s35, %s36
      %p38 = scmp.eq.s32.totalorder %s37, 0
      %s40 = sadd.s32 %s39, 1
      %s41 = scalar_select %p38, %s39, %s40
      %p44 = pneg %p38
      %p45 = scmp.eq.s32.totalorder %s15, 1
      %p46 = por %p44, %p45
      %p47 = scmp.ne.s32.totalorder %s39, %s42
      %p48 = scmp.eq.s32.totalorder %s15, 0
      %p49 = por %p47, %p48
      %p50 = scmp.ne.s32.totalorder %s39, %s42
      %p51 = scmp.eq.s32.totalorder %s20, 1
      %p52 = por %p50, %p51
      %p53 = scmp.ne.s32.totalorder %s42, %s43
      %p54 = scmp.eq.s32.totalorder %s20, 0
      %p55 = por %p53, %p54
      %p56 = scmp.ne.s32.totalorder %s42, %s43
      %p57 = scmp.eq.s32.totalorder %s21, 1
      %p58 = por %p56, %p57
      %p60 = scmp.ne.s32.totalorder %s43, %s59
      %p61 = scmp.eq.s32.totalorder %s21, 0
      %p62 = por %p60, %p61
      %s64 = sadd.s32 %s63, 1
      %p67 = scmp.eq.s32.totalorder %s15, 1
      %p68 = scmp.ne.s32.totalorder %s63, %s65
      %p69 = scmp.eq.s32.totalorder %s15, 0
      %p70 = por %p68, %p69
      %p71 = scmp.ne.s32.totalorder %s63, %s65
      %p72 = scmp.eq.s32.totalorder %s20, 1
      %p73 = por %p71, %p72
      %p74 = scmp.ne.s32.totalorder %s65, %s66
      %p75 = scmp.eq.s32.totalorder %s20, 0
      %p76 = por %p74, %p75
      %p77 = scmp.ne.s32.totalorder %s65, %s66
      %p78 = scmp.eq.s32.totalorder %s21, 1
      %p79 = por %p77, %p78
      %p81 = scmp.ne.s32.totalorder %s66, %s80
      %p82 = scmp.eq.s32.totalorder %s21, 0
      %p83 = por %p81, %p82
      %s85 = sadd.s32 %s84, 1
      %p88 = scmp.eq.s32.totalorder %s15, 1
      %p89 = scmp.ne.s32.totalorder %s84, %s86
      %p90 = scmp.eq.s32.totalorder %s15, 0
      %p91 = por %p89, %p90
      %p92 = scmp.ne.s32.totalorder %s84, %s86
      %p93 = scmp.eq.s32.totalorder %s20, 1
      %p94 = por %p92, %p93
      %p95 = scmp.ne.s32.totalorder %s86, %s87
      %p96 = scmp.eq.s32.totalorder %s20, 0
      %p97 = por %p95, %p96
      %p98 = scmp.ne.s32.totalorder %s86, %s87
      %p99 = scmp.eq.s32.totalorder %s21, 1
      %p100 = por %p98, %p99
      %p102 = scmp.ne.s32.totalorder %s87, %s101
      %p103 = scmp.eq.s32.totalorder %s21, 0
      %p104 = por %p102, %p103
      %s106 = sadd.s32 %s105, 1
      %p109 = scmp.eq.s32.totalorder %s15, 1
      %p110 = scmp.ne.s32.totalorder %s105, %s107
      %p111 = scmp.eq.s32.totalorder %s15, 0
      %p112 = por %p110, %p111
      %p113 = scmp.ne.s32.totalorder %s105, %s107
      %p114 = scmp.eq.s32.totalorder %s20, 1
      %p115 = por %p113, %p114
      %p116 = scmp.ne.s32.totalorder %s107, %s108
      %p117 = scmp.eq.s32.totalorder %s20, 0
      %p118 = por %p116, %p117
      %p119 = scmp.ne.s32.totalorder %s107, %s108
      %p120 = scmp.eq.s32.totalorder %s21, 1
      %p121 = por %p119, %p120
      %p123 = scmp.ne.s32.totalorder %s108, %s122
      %p124 = scmp.eq.s32.totalorder %s21, 0
      %p125 = por %p123, %p124
      %s127 = sadd.s32 %s126, 1
      %p130 = scmp.eq.s32.totalorder %s15, 1
      %p131 = scmp.ne.s32.totalorder %s126, %s128
      %p132 = scmp.eq.s32.totalorder %s15, 0
      %p133 = por %p131, %p132
      %p134 = scmp.ne.s32.totalorder %s126, %s128
      %p135 = scmp.eq.s32.totalorder %s20, 1
      %p136 = por %p134, %p135
      %p137 = scmp.ne.s32.totalorder %s128, %s129
      %p138 = scmp.eq.s32.totalorder %s20, 0
      %p139 = por %p137, %p138
      %p140 = scmp.ne.s32.totalorder %s128, %s129
      %p141 = scmp.eq.s32.totalorder %s21, 1
      %p142 = por %p140, %p141
      %p144 = scmp.ne.s32.totalorder %s129, %s143
      %p145 = scmp.eq.s32.totalorder %s21, 0
      %p146 = por %p144, %p145
      %s148 = sadd.s32 %s147, 1
      %p151 = scmp.eq.s32.totalorder %s15, 1
      %p152 = scmp.ne.s32.totalorder %s147, %s149
      %p153 = scmp.eq.s32.totalorder %s15, 0
      %p154 = por %p152, %p153
      %p155 = scmp.ne.s32.totalorder %s147, %s149
      %p156 = scmp.eq.s32.totalorder %s20, 1
      %p157 = por %p155, %p156
      %p158 = scmp.ne.s32.totalorder %s149, %s150
      %p159 = scmp.eq.s32.totalorder %s20, 0
      %p160 = por %p158, %p159
      %p161 = scmp.ne.s32.totalorder %s149, %s150
      %p162 = scmp.eq.s32.totalorder %s21, 1
      %p163 = por %p161, %p162
      %p165 = scmp.ne.s32.totalorder %s150, %s164
      %p166 = scmp.eq.s32.totalorder %s21, 0
      %p167 = por %p165, %p166
      %s168 = ssub.s32 %s22, %s34
      %p169 = scmp.eq.s32.totalorder %s168, 0
      %s171 = sadd.s32 %s170, 1
      %s172 = scalar_select %p169, %s170, %s171
      %p175 = pneg %p169
      %p176 = scmp.eq.s32.totalorder %s15, 1
      %p177 = por %p175, %p176
      %p178 = scmp.ne.s32.totalorder %s170, %s173
      %p179 = scmp.eq.s32.totalorder %s15, 0
      %p180 = por %p178, %p179
      %p181 = scmp.ne.s32.totalorder %s170, %s173
      %p182 = scmp.eq.s32.totalorder %s20, 1
      %p183 = por %p181, %p182
      %p184 = scmp.ne.s32.totalorder %s173, %s174
      %p185 = scmp.eq.s32.totalorder %s20, 0
      %p186 = por %p184, %p185
      %p187 = scmp.ne.s32.totalorder %s173, %s174
      %p188 = scmp.eq.s32.totalorder %s21, 1
      %p189 = por %p187, %p188
      %p191 = scmp.ne.s32.totalorder %s174, %s190
      %p192 = scmp.eq.s32.totalorder %s21, 0
      %p193 = por %p191, %p192
      %p194 = scmp.le.s32.totalorder 1, %s15
      %p195 = scmp.lt.s32.totalorder %s15, 3
      %p196 = pnand %p194, %p195
      %p197 = pneg %p196
      // Predicated region
      $region9: #{monkey_recognition_forward.1} parent=5 // pred_check
        _
      $region10: #{monkey_recognition_forward.1} parent=5 // pred_check_branch
        %199 = sbr.rel (%p196) target = $region12
      $region11: #{monkey_recognition_forward.1} parent=5 // pred_region
        %s200 = ssub.s32 %s15, 1
        // Predicated region
        $region13: #{monkey_recognition_forward.1} parent=11 // pred_check
          %p201 = pneg %p76
        $region14: #{monkey_recognition_forward.1} parent=11 // pred_check_branch
          %203 = sbr.rel (%p201) target = $region16
        $region15: #{monkey_recognition_forward.1} parent=11 // pred_region
          _
        $region16: #{monkey_recognition_forward.1} parent=11 // pred_fallthru
          _
        // Predicated region
        $region17: #{monkey_recognition_forward.1} parent=11 // pred_check
          %p204 = pneg %p97
        $region18: #{monkey_recognition_forward.1} parent=11 // pred_check_branch
          %206 = sbr.rel (%p204) target = $region20
        $region19: #{monkey_recognition_forward.1} parent=11 // pred_region
          _
        $region20: #{monkey_recognition_forward.1} parent=11 // pred_fallthru
          _
        // Predicated region
        $region21: #{monkey_recognition_forward.1} parent=11 // pred_check
          %p207 = pneg %p118
        $region22: #{monkey_recognition_forward.1} parent=11 // pred_check_branch
          %209 = sbr.rel (%p207) target = $region24
        $region23: #{monkey_recognition_forward.1} parent=11 // pred_region
          _
        $region24: #{monkey_recognition_forward.1} parent=11 // pred_fallthru
          _
        // Predicated region
        $region25: #{monkey_recognition_forward.1} parent=11 // pred_check
          %p210 = pneg %p139
        $region26: #{monkey_recognition_forward.1} parent=11 // pred_check_branch
          %212 = sbr.rel (%p210) target = $region28
        $region27: #{monkey_recognition_forward.1} parent=11 // pred_region
          _
        $region28: #{monkey_recognition_forward.1} parent=11 // pred_fallthru
          _
        // Predicated region
        $region29: #{monkey_recognition_forward.1} parent=11 // pred_check
          %p213 = pneg %p160
        $region30: #{monkey_recognition_forward.1} parent=11 // pred_check_branch
          %215 = sbr.rel (%p213) target = $region32
        $region31: #{monkey_recognition_forward.1} parent=11 // pred_region
          _
        $region32: #{monkey_recognition_forward.1} parent=11 // pred_fallthru
          _
      $region12: #{monkey_recognition_forward.1} parent=5 // pred_fallthru
        _
      %p216 = scmp.lt.s32.totalorder %s15, 2
      // Predicated region
      $region33: #{monkey_recognition_forward.1} parent=5 // pred_check
        %p217 = pneg %p216
      $region34: #{monkey_recognition_forward.1} parent=5 // pred_check_branch
        %219 = sbr.rel (%p217) target = $region36
      $region35: #{monkey_recognition_forward.1} parent=5 // pred_region
        // Predicated region
        $region37: #{monkey_recognition_forward.1} parent=35 // pred_check
          %p220 = pneg %p49
        $region38: #{monkey_recognition_forward.1} parent=35 // pred_check_branch
          %222 = sbr.rel (%p220) target = $region40
        $region39: #{monkey_recognition_forward.1} parent=35 // pred_region
          %p223 = scmp.lt.s32.totalorder %s22, 1
          %s224 = scalar_select %p223, %s22, 1
          %p225 = scmp.lt.s32.totalorder %s23, 0
          %s226 = scalar_select %p225, %s23, 0
          %s227 = smul.addr %s226, 32
          %s228 = smul.addr %s224, 32
          %s229 = sadd.s32 %s227, %s228
          %s230 = smul.addr %s229, 4
          %s231 = scalar_lea.vmem %s0, %s230
        $region40: #{monkey_recognition_forward.1} parent=35 // pred_fallthru
          _
      $region36: #{monkey_recognition_forward.1} parent=5 // pred_fallthru
        _
      %p232 = scmp.le.s32.totalorder 1, %s15
      %p233 = scmp.lt.s32.totalorder %s15, 3
      %p234 = pnand %p232, %p233
      %p235 = pneg %p234
      // Predicated region
      $region41: #{monkey_recognition_forward.1} parent=5 // pred_check
        _
      $region42: #{monkey_recognition_forward.1} parent=5 // pred_check_branch
        %237 = sbr.rel (%p234) target = $region44
      $region43: #{monkey_recognition_forward.1} parent=5 // pred_region
        %s238 = ssub.s32 %s15, 1
        %p239 = scmp.lt.s32.totalorder %s24, 1
        %s240 = scalar_select %p239, %s24, 1
        %p241 = scmp.lt.s32.totalorder %s25, 0
        %s242 = scalar_select %p241, %s25, 0
        %s243 = smul.addr %s242, 32
        %s244 = smul.addr %s240, 32
        %s245 = sadd.s32 %s243, %s244
        %s246 = smul.addr %s245, 4
        %s247 = scalar_lea.vmem %s0, %s246
        %p248 = pneg %p55
        %p249 = pneg %p52
        %p250 = pneg %p76
        %p251 = pneg %p73
        %p252 = pneg %p97
        %p253 = pneg %p94
        %p254 = pneg %p118
        %p255 = pneg %p115
        %p256 = pneg %p139
        %p257 = pneg %p136
        %p258 = pneg %p160
        %p259 = pneg %p157
        %p260 = pneg %p186
        %p261 = pneg %p183
        %s262 = sand.u32 %s173, 1
        %s263 = scalar_lea.sflag [#allocation4], %s262
        %s264 = sand.u32 %s173, 1
        %s265 = scalar_lea.vmem [#allocation3], %s264
        %p266 = scmp.lt.s32.totalorder %s24, 1
        %s267 = scalar_select %p266, %s24, 1
        %p268 = scmp.lt.s32.totalorder %s25, 0
        %s269 = scalar_select %p268, %s25, 0
        %s270 = smul.addr %s269, 32
        %s271 = smul.addr %s267, 32
        %s272 = sadd.s32 %s270, %s271
        %s273 = smul.addr %s272, 4
        %s274 = scalar_lea.vmem %s0, %s273
        %p276 = scmp.eq.s32.totalorder %s25, 0
        // Predicated region
        $region45: #{monkey_recognition_forward.1} parent=43 // pred_check
          %p277 = pneg %p276
        $region46: #{monkey_recognition_forward.1} parent=43 // pred_check_branch
          %279 = sbr.rel (%p277) target = $region48
        $region47: #{monkey_recognition_forward.1} parent=43 // pred_region
          %280 = vst [vmem:[#allocation2] sm:$0x1] 0.0
        $region48: #{monkey_recognition_forward.1} parent=43 // pred_fallthru
          _
        %v281 = vld [vmem:[%s274] sm:$0xf]
        %v282 = vld [vmem:[%s274 + $0x4] sm:$0xf]
        %v283 = vld [vmem:[%s274 + $0x8] sm:$0xf]
        %v284 = vld [vmem:[%s274 + $0xc] sm:$0xf]
        %v285 = vld [vmem:[%s274 + $0x10] sm:$0xf]
        %v286 = vld [vmem:[%s274 + $0x14] sm:$0xf]
        %v287 = vld [vmem:[%s274 + $0x18] sm:$0xf]
        %v288 = vld [vmem:[%s274 + $0x1c] sm:$0xf]
        %v289 = vld [vmem:[%s274 + $0x20] sm:$0xf]
        %v290 = vld [vmem:[%s274 + $0x24] sm:$0xf]
        %v291 = vld [vmem:[%s274 + $0x28] sm:$0xf]
        %v292 = vld [vmem:[%s274 + $0x2c] sm:$0xf]
        %v293 = vld [vmem:[%s274 + $0x30] sm:$0xf]
        %v294 = vld [vmem:[%s274 + $0x34] sm:$0xf]
        %v295 = vld [vmem:[%s274 + $0x38] sm:$0xf]
        %v296 = vld [vmem:[%s274 + $0x3c] sm:$0xf]
        %v297 = vld [vmem:[%s274 + $0x40] sm:$0xf]
        %v298 = vld [vmem:[%s274 + $0x44] sm:$0xf]
        %v299 = vld [vmem:[%s274 + $0x48] sm:$0xf]
        %v300 = vld [vmem:[%s274 + $0x4c] sm:$0xf]
        %v301 = vld [vmem:[%s274 + $0x50] sm:$0xf]
        %v302 = vld [vmem:[%s274 + $0x54] sm:$0xf]
        %v303 = vld [vmem:[%s274 + $0x58] sm:$0xf]
        %v304 = vld [vmem:[%s274 + $0x5c] sm:$0xf]
        %v305 = vld [vmem:[%s274 + $0x60] sm:$0xf]
        %v306 = vld [vmem:[%s274 + $0x64] sm:$0xf]
        %v307 = vld [vmem:[%s274 + $0x68] sm:$0xf]
        %v308 = vld [vmem:[%s274 + $0x6c] sm:$0xf]
        %v309 = vld [vmem:[%s274 + $0x70] sm:$0xf]
        %v310 = vld [vmem:[%s274 + $0x74] sm:$0xf]
        %v311 = vld [vmem:[%s274 + $0x78] sm:$0xf]
        %v312 = vld [vmem:[%s274 + $0x7c] sm:$0xf]
        %v313 = vld [vmem:[%s1] sm:$0xf]
        %v314 = vld [vmem:[%s1 + $0x4] sm:$0xf]
        %v315 = vld [vmem:[%s1 + $0x8] sm:$0xf]
        %v316 = vld [vmem:[%s1 + $0xc] sm:$0xf]
        %v317 = vld [vmem:[%s2] sm:$0x1]
        %v319 = vlaneseq
        %v320 = vshrl.u32 %v319, 7
        %v321 = vsub.s32 0, %v320
        %v322 = vrot.slane %v317, %v321
        %v356 = vunpack.c.l.b16 %v281
        %v357 = vunpack.c.l.b16 %v282
        %v358 = vunpack.c.l.b16 %v283
        %v359 = vunpack.c.l.b16 %v284
        %v360 = vunpack.c.l.b16 %v285
        %v361 = vunpack.c.l.b16 %v286
        %v362 = vunpack.c.l.b16 %v287
        %v363 = vunpack.c.l.b16 %v288
        %v364 = vunpack.c.l.b16 %v289
        %v365 = vunpack.c.l.b16 %v290
        %v366 = vunpack.c.l.b16 %v291
        %v367 = vunpack.c.l.b16 %v292
        %v368 = vunpack.c.l.b16 %v293
        %v369 = vunpack.c.l.b16 %v294
        %v370 = vunpack.c.l.b16 %v295
        %v371 = vunpack.c.l.b16 %v296
        %v372 = vunpack.c.l.b16 %v297
        %v373 = vunpack.c.l.b16 %v298
        %v374 = vunpack.c.l.b16 %v299
        %v375 = vunpack.c.l.b16 %v300
        %v376 = vunpack.c.l.b16 %v301
        %v377 = vunpack.c.l.b16 %v302
        %v378 = vunpack.c.l.b16 %v303
        %v379 = vunpack.c.l.b16 %v304
        %v380 = vunpack.c.l.b16 %v305
        %v381 = vunpack.c.l.b16 %v306
        %v382 = vunpack.c.l.b16 %v307
        %v383 = vunpack.c.l.b16 %v308
        %v384 = vunpack.c.l.b16 %v309
        %v385 = vunpack.c.l.b16 %v310
        %v386 = vunpack.c.l.b16 %v311
        %v387 = vunpack.c.l.b16 %v312
        %v388 = vpack.c.b16 %v357, %v356
        %v389 = vpack.c.b16 %v359, %v358
        %v390 = vpack.c.b16 %v361, %v360
        %v391 = vpack.c.b16 %v363, %v362
        %v392 = vpack.c.b16 %v365, %v364
        %v393 = vpack.c.b16 %v367, %v366
        %v394 = vpack.c.b16 %v369, %v368
        %v395 = vpack.c.b16 %v371, %v370
        %v396 = vpack.c.b16 %v373, %v372
        %v397 = vpack.c.b16 %v375, %v374
        %v398 = vpack.c.b16 %v377, %v376
        %v399 = vpack.c.b16 %v379, %v378
        %v400 = vpack.c.b16 %v381, %v380
        %v401 = vpack.c.b16 %v383, %v382
        %v402 = vpack.c.b16 %v385, %v384
        %v403 = vpack.c.b16 %v387, %v386
        %v408 = vunpack.c.l.b16 %v313
        %v409 = vunpack.c.l.b16 %v314
        %v410 = vunpack.c.l.b16 %v315
        %v411 = vunpack.c.l.b16 %v316
        %v412 = vpack.c.b16 %v409, %v408
        %v413 = vpack.c.b16 %v411, %v410
        %vm416 = vcmask 261120
        %v418 = vsel %vm416, %v388, 0
        %v421 = vsel %vm416, %v389, 0
        %v424 = vsel %vm416, %v390, 0
        %v427 = vsel %vm416, %v391, 0
        %v430 = vsel %vm416, %v392, 0
        %v433 = vsel %vm416, %v393, 0
        %v436 = vsel %vm416, %v394, 0
        %v439 = vsel %vm416, %v395, 0
        %v442 = vsel %vm416, %v396, 0
        %v445 = vsel %vm416, %v397, 0
        %v448 = vsel %vm416, %v398, 0
        %v451 = vsel %vm416, %v399, 0
        %v454 = vsel %vm416, %v400, 0
        %v457 = vsel %vm416, %v401, 0
        %v460 = vsel %vm416, %v402, 0
        %v463 = vsel %vm416, %v403, 0
        %465 = vmatprep.subr.bf16.mxu0 0
        %466 = vmatpush1.bf16.msra.mxu0 0
        %467 = vmatprep.subr.bf16.mxu0 0
        %468 = vmatpush1.bf16.msra.mxu0 0
        %469 = vmatprep.subr.bf16.mxu0 0
        %470 = vmatpush1.bf16.msra.mxu0 0
        %471 = vmatprep.subr.bf16.mxu0 0
        %472 = vmatpush1.bf16.msra.mxu0 0
        %473 = vmatprep.subr.bf16.mxu0 0
        %474 = vmatpush1.bf16.msra.mxu0 0
        %475 = vmatprep.subr.bf16.mxu0 0
        %476 = vmatpush1.bf16.msra.mxu0 0
        %477 = vmatprep.subr.bf16.mxu0 0
        %478 = vmatpush1.bf16.msra.mxu0 %v413
        %479 = vmatprep.subr.bf16.mxu0 0
        %480 = vmatpush1.bf16.msra.mxu0 %v412
        %481 = vmatprep.subr.bf16.mxu0 0
        %482 = vmatpush2.bf16.msra.mxu0 0
        %483 = vmatprep.subr.bf16.mxu0 0
        %484 = vmatpush2.bf16.msra.mxu0 0
        %485 = vmatprep.subr.bf16.mxu0 0
        %486 = vmatpush2.bf16.msra.mxu0 0
        %487 = vmatprep.subr.bf16.mxu0 0
        %488 = vmatpush2.bf16.msra.mxu0 0
        %489 = vmatprep.subr.bf16.mxu0 0
        %490 = vmatpush2.bf16.msra.mxu0 0
        %491 = vmatprep.subr.bf16.mxu0 0
        %492 = vmatpush2.bf16.msra.mxu0 0
        %493 = vmatprep.subr.bf16.mxu0 0
        %494 = vmatpush2.bf16.msra.mxu0 0
        %495 = vmatprep.subr.bf16.mxu0 0
        %496 = vmatpush2.bf16.msra.mxu0 0
        %497 = vmatprep.mubr.bf16.mxu0 0
        %498 = vmatmul.mubr.bf16.gmra.mxu0 %v418
        %v499 = vpop.f32.mrf.mxu0
        %v500 = vadd.f32 %v322, %v499
        %v501 = vpop.f32.mrf.mxu0
        %v502 = vpop.f32.mrf.mxu0
        %v503 = vadd.f32 %v322, %v502
        %v504 = vpop.f32.mrf.mxu0
        %505 = vmatprep.mubr.bf16.mxu0 0
        %506 = vmatmul.mubr.bf16.gmra.mxu0 %v421
        %v507 = vpop.f32.mrf.mxu0
        %v508 = vadd.f32 %v322, %v507
        %v509 = vpop.f32.mrf.mxu0
        %v510 = vpop.f32.mrf.mxu0
        %v511 = vadd.f32 %v322, %v510
        %v512 = vpop.f32.mrf.mxu0
        %513 = vmatprep.mubr.bf16.mxu0 0
        %514 = vmatmul.mubr.bf16.gmra.mxu0 %v424
        %v515 = vpop.f32.mrf.mxu0
        %v516 = vadd.f32 %v322, %v515
        %v517 = vpop.f32.mrf.mxu0
        %v518 = vpop.f32.mrf.mxu0
        %v519 = vadd.f32 %v322, %v518
        %v520 = vpop.f32.mrf.mxu0
        %521 = vmatprep.mubr.bf16.mxu0 0
        %522 = vmatmul.mubr.bf16.gmra.mxu0 %v427
        %v523 = vpop.f32.mrf.mxu0
        %v524 = vadd.f32 %v322, %v523
        %v525 = vpop.f32.mrf.mxu0
        %v526 = vpop.f32.mrf.mxu0
        %v527 = vadd.f32 %v322, %v526
        %v528 = vpop.f32.mrf.mxu0
        %529 = vmatprep.mubr.bf16.mxu0 0
        %530 = vmatmul.mubr.bf16.gmra.mxu0 %v430
        %v531 = vpop.f32.mrf.mxu0
        %v532 = vadd.f32 %v322, %v531
        %v533 = vpop.f32.mrf.mxu0
        %v534 = vpop.f32.mrf.mxu0
        %v535 = vadd.f32 %v322, %v534
        %v536 = vpop.f32.mrf.mxu0
        %537 = vmatprep.mubr.bf16.mxu0 0
        %538 = vmatmul.mubr.bf16.gmra.mxu0 %v433
        %v539 = vpop.f32.mrf.mxu0
        %v540 = vadd.f32 %v322, %v539
        %v541 = vpop.f32.mrf.mxu0
        %v542 = vpop.f32.mrf.mxu0
        %v543 = vadd.f32 %v322, %v542
        %v544 = vpop.f32.mrf.mxu0
        %545 = vmatprep.mubr.bf16.mxu0 0
        %546 = vmatmul.mubr.bf16.gmra.mxu0 %v436
        %v547 = vpop.f32.mrf.mxu0
        %v548 = vadd.f32 %v322, %v547
        %v549 = vpop.f32.mrf.mxu0
        %v550 = vpop.f32.mrf.mxu0
        %v551 = vadd.f32 %v322, %v550
        %v552 = vpop.f32.mrf.mxu0
        %553 = vmatprep.mubr.bf16.mxu0 0
        %554 = vmatmul.mubr.bf16.gmra.mxu0 %v439
        %v555 = vpop.f32.mrf.mxu0
        %v556 = vadd.f32 %v322, %v555
        %v557 = vpop.f32.mrf.mxu0
        %v558 = vpop.f32.mrf.mxu0
        %v559 = vadd.f32 %v322, %v558
        %v560 = vpop.f32.mrf.mxu0
        %561 = vmatprep.mubr.bf16.mxu0 0
        %562 = vmatmul.mubr.bf16.gmra.mxu0 %v442
        %v563 = vpop.f32.mrf.mxu0
        %v564 = vadd.f32 %v322, %v563
        %v565 = vpop.f32.mrf.mxu0
        %v566 = vpop.f32.mrf.mxu0
        %v567 = vadd.f32 %v322, %v566
        %v568 = vpop.f32.mrf.mxu0
        %569 = vmatprep.mubr.bf16.mxu0 0
        %570 = vmatmul.mubr.bf16.gmra.mxu0 %v445
        %v571 = vpop.f32.mrf.mxu0
        %v572 = vadd.f32 %v322, %v571
        %v573 = vpop.f32.mrf.mxu0
        %v574 = vpop.f32.mrf.mxu0
        %v575 = vadd.f32 %v322, %v574
        %v576 = vpop.f32.mrf.mxu0
        %577 = vmatprep.mubr.bf16.mxu0 0
        %578 = vmatmul.mubr.bf16.gmra.mxu0 %v448
        %v579 = vpop.f32.mrf.mxu0
        %v580 = vadd.f32 %v322, %v579
        %v581 = vpop.f32.mrf.mxu0
        %v582 = vpop.f32.mrf.mxu0
        %v583 = vadd.f32 %v322, %v582
        %v584 = vpop.f32.mrf.mxu0
        %585 = vmatprep.mubr.bf16.mxu0 0
        %586 = vmatmul.mubr.bf16.gmra.mxu0 %v451
        %v587 = vpop.f32.mrf.mxu0
        %v588 = vadd.f32 %v322, %v587
        %v589 = vpop.f32.mrf.mxu0
        %v590 = vpop.f32.mrf.mxu0
        %v591 = vadd.f32 %v322, %v590
        %v592 = vpop.f32.mrf.mxu0
        %593 = vmatprep.mubr.bf16.mxu0 0
        %594 = vmatmul.mubr.bf16.gmra.mxu0 %v454
        %v595 = vpop.f32.mrf.mxu0
        %v596 = vadd.f32 %v322, %v595
        %v597 = vpop.f32.mrf.mxu0
        %v598 = vpop.f32.mrf.mxu0
        %v599 = vadd.f32 %v322, %v598
        %v600 = vpop.f32.mrf.mxu0
        %601 = vmatprep.mubr.bf16.mxu0 0
        %602 = vmatmul.mubr.bf16.gmra.mxu0 %v457
        %v603 = vpop.f32.mrf.mxu0
        %v604 = vadd.f32 %v322, %v603
        %v605 = vpop.f32.mrf.mxu0
        %v606 = vpop.f32.mrf.mxu0
        %v607 = vadd.f32 %v322, %v606
        %v608 = vpop.f32.mrf.mxu0
        %609 = vmatprep.mubr.bf16.mxu0 0
        %610 = vmatmul.mubr.bf16.gmra.mxu0 %v460
        %v611 = vpop.f32.mrf.mxu0
        %v612 = vadd.f32 %v322, %v611
        %v613 = vpop.f32.mrf.mxu0
        %v614 = vpop.f32.mrf.mxu0
        %v615 = vadd.f32 %v322, %v614
        %v616 = vpop.f32.mrf.mxu0
        %617 = vmatprep.mubr.bf16.mxu0 0
        %618 = vmatmul.mubr.bf16.gmra.mxu0 %v463
        %v619 = vpop.f32.mrf.mxu0
        %v620 = vadd.f32 %v322, %v619
        %v621 = vpop.f32.mrf.mxu0
        %v622 = vpop.f32.mrf.mxu0
        %v623 = vadd.f32 %v322, %v622
        %v624 = vpop.f32.mrf.mxu0
        %625 = vdwg.mxu0
        %v626 = vmax.f32 %v500, 0.0
        %v627 = vmax.f32 %v503, 0.0
        %v628 = vmax.f32 %v508, 0.0
        %v629 = vmax.f32 %v511, 0.0
        %v630 = vmax.f32 %v516, 0.0
        %v631 = vmax.f32 %v519, 0.0
        %v632 = vmax.f32 %v524, 0.0
        %v633 = vmax.f32 %v527, 0.0
        %v634 = vmax.f32 %v532, 0.0
        %v635 = vmax.f32 %v535, 0.0
        %v636 = vmax.f32 %v540, 0.0
        %v637 = vmax.f32 %v543, 0.0
        %v638 = vmax.f32 %v548, 0.0
        %v639 = vmax.f32 %v551, 0.0
        %v640 = vmax.f32 %v556, 0.0
        %v641 = vmax.f32 %v559, 0.0
        %v642 = vmax.f32 %v564, 0.0
        %v643 = vmax.f32 %v567, 0.0
        %v644 = vmax.f32 %v572, 0.0
        %v645 = vmax.f32 %v575, 0.0
        %v646 = vmax.f32 %v580, 0.0
        %v647 = vmax.f32 %v583, 0.0
        %v648 = vmax.f32 %v588, 0.0
        %v649 = vmax.f32 %v591, 0.0
        %v650 = vmax.f32 %v596, 0.0
        %v651 = vmax.f32 %v599, 0.0
        %v652 = vmax.f32 %v604, 0.0
        %v653 = vmax.f32 %v607, 0.0
        %v654 = vmax.f32 %v612, 0.0
        %v655 = vmax.f32 %v615, 0.0
        %v656 = vmax.f32 %v620, 0.0
        %v657 = vmax.f32 %v623, 0.0
        %v658 = vld [vmem:[#allocation2] sm:$0x1]
        %v659 = vadd.f32 %v626, %v627
        %v660 = vadd.f32 %v659, %v628
        %v661 = vadd.f32 %v660, %v629
        %v662 = vadd.f32 %v661, %v630
        %v663 = vadd.f32 %v662, %v631
        %v664 = vadd.f32 %v663, %v632
        %v665 = vadd.f32 %v664, %v633
        %v666 = vadd.f32 %v665, %v634
        %v667 = vadd.f32 %v666, %v635
        %v668 = vadd.f32 %v667, %v636
        %v669 = vadd.f32 %v668, %v637
        %v670 = vadd.f32 %v669, %v638
        %v671 = vadd.f32 %v670, %v639
        %v672 = vadd.f32 %v671, %v640
        %v673 = vadd.f32 %v672, %v641
        %v674 = vadd.f32 %v673, %v642
        %v675 = vadd.f32 %v674, %v643
        %v676 = vadd.f32 %v675, %v644
        %v677 = vadd.f32 %v676, %v645
        %v678 = vadd.f32 %v677, %v646
        %v679 = vadd.f32 %v678, %v647
        %v680 = vadd.f32 %v679, %v648
        %v681 = vadd.f32 %v680, %v649
        %v682 = vadd.f32 %v681, %v650
        %v683 = vadd.f32 %v682, %v651
        %v684 = vadd.f32 %v683, %v652
        %v685 = vadd.f32 %v684, %v653
        %v686 = vadd.f32 %v685, %v654
        %v687 = vadd.f32 %v686, %v655
        %v688 = vadd.f32 %v687, %v656
        %v689 = vadd.f32 %v688, %v657
        %v690 = vrot.slane %v689, 4
        %v691 = vadd.f32 %v689, %v690
        %v692 = vrot.slane %v691, 2
        %v693 = vadd.f32 %v691, %v692
        %v694 = vrot.slane %v693, 1
        %v695 = vadd.f32 %v693, %v694
        %v696 = vadd.f32 %v658, %v695
        %697 = vst [vmem:[#allocation2] sm:$0x1] %v696
        // Predicated region
        $region49: #{monkey_recognition_forward.1} parent=43 // pred_check
          %p698 = pneg %p276
        $region50: #{monkey_recognition_forward.1} parent=43 // pred_check_branch
          %700 = sbr.rel (%p698) target = $region52
        $region51: #{monkey_recognition_forward.1} parent=43 // pred_region
          %v701 = vld [vmem:[#allocation2] sm:$0x1]
          %v702 = vld [vmem:[%s3] sm:$0xff]
          %v703 = vld [vmem:[%s3 + $0x8] sm:$0xff]
          %v704 = vld [vmem:[%s3 + $0x10] sm:$0xff]
          %v705 = vld [vmem:[%s3 + $0x18] sm:$0xff]
          %v706 = vld [vmem:[%s3 + $0x20] sm:$0xff]
          %v707 = vld [vmem:[%s3 + $0x28] sm:$0xff]
          %v708 = vld [vmem:[%s3 + $0x30] sm:$0xff]
          %v709 = vld [vmem:[%s3 + $0x38] sm:$0xff]
          %v710 = vld [vmem:[%s3 + $0x40] sm:$0xff]
          %v711 = vld [vmem:[%s3 + $0x48] sm:$0xff]
          %v712 = vld [vmem:[%s3 + $0x50] sm:$0xff]
          %v713 = vld [vmem:[%s3 + $0x58] sm:$0xff]
          %v714 = vld [vmem:[%s3 + $0x60] sm:$0xff]
          %v715 = vld [vmem:[%s3 + $0x68] sm:$0xff]
          %v716 = vld [vmem:[%s3 + $0x70] sm:$0xff]
          %v717 = vld [vmem:[%s3 + $0x78] sm:$0xff]
          %v718 = vld [vmem:[%s4] sm:$0x1]
          %719 = vmatprep.subr.mxu0 0.0
          %720 = vmatpush1.msra.mxu0 %v717
          %721 = vmatprep.subr.mxu0 0.0
          %722 = vmatpush1.msra.mxu0 %v716
          %723 = vmatprep.subr.mxu0 0.0
          %724 = vmatpush1.msra.mxu0 %v715
          %725 = vmatprep.subr.mxu0 0.0
          %726 = vmatpush1.msra.mxu0 %v714
          %727 = vmatprep.subr.mxu0 0.0
          %728 = vmatpush1.msra.mxu0 %v713
          %729 = vmatprep.subr.mxu0 0.0
          %730 = vmatpush1.msra.mxu0 %v712
          %731 = vmatprep.subr.mxu0 0.0
          %732 = vmatpush1.msra.mxu0 %v711
          %733 = vmatprep.subr.mxu0 0.0
          %734 = vmatpush1.msra.mxu0 %v710
          %735 = vmatprep.subr.mxu0 0.0
          %736 = vmatpush1.msra.mxu0 %v709
          %737 = vmatprep.subr.mxu0 0.0
          %738 = vmatpush1.msra.mxu0 %v708
          %739 = vmatprep.subr.mxu0 0.0
          %740 = vmatpush1.msra.mxu0 %v707
          %741 = vmatprep.subr.mxu0 0.0
          %742 = vmatpush1.msra.mxu0 %v706
          %743 = vmatprep.subr.mxu0 0.0
          %744 = vmatpush1.msra.mxu0 %v705
          %745 = vmatprep.subr.mxu0 0.0
          %746 = vmatpush1.msra.mxu0 %v704
          %747 = vmatprep.subr.mxu0 0.0
          %748 = vmatpush1.msra.mxu0 %v703
          %749 = vmatprep.subr.mxu0 0.0
          %750 = vmatpush1.msra.mxu0 %v702
          %751 = vmatprep.subr.mxu0 0.0
          %752 = vmatpush2.msra.mxu0 0.0
          %753 = vmatprep.subr.mxu0 0.0
          %754 = vmatpush2.msra.mxu0 0.0
          %755 = vmatprep.subr.mxu0 0.0
          %756 = vmatpush2.msra.mxu0 0.0
          %757 = vmatprep.subr.mxu0 0.0
          %758 = vmatpush2.msra.mxu0 0.0
          %759 = vmatprep.subr.mxu0 0.0
          %760 = vmatpush2.msra.mxu0 0.0
          %761 = vmatprep.subr.mxu0 0.0
          %762 = vmatpush2.msra.mxu0 0.0
          %763 = vmatprep.subr.mxu0 0.0
          %764 = vmatpush2.msra.mxu0 0.0
          %765 = vmatprep.subr.mxu0 0.0
          %766 = vmatpush2.msra.mxu0 0.0
          %767 = vmatprep.subr.mxu0 0.0
          %768 = vmatpush2.msra.mxu0 0.0
          %769 = vmatprep.subr.mxu0 0.0
          %770 = vmatpush2.msra.mxu0 0.0
          %771 = vmatprep.subr.mxu0 0.0
          %772 = vmatpush2.msra.mxu0 0.0
          %773 = vmatprep.subr.mxu0 0.0
          %774 = vmatpush2.msra.mxu0 0.0
          %775 = vmatprep.subr.mxu0 0.0
          %776 = vmatpush2.msra.mxu0 0.0
          %777 = vmatprep.subr.mxu0 0.0
          %778 = vmatpush2.msra.mxu0 0.0
          %779 = vmatprep.subr.mxu0 0.0
          %780 = vmatpush2.msra.mxu0 0.0
          %781 = vmatprep.subr.mxu0 0.0
          %782 = vmatpush2.msra.mxu0 0.0
          %783 = vmatprep.mubr.f32.mxu0 0.0
          %784 = vmatmul.mubr.f32.gmra.mxu0 %v701
          %v785 = vpop.f32.mrf.mxu0
          %v786 = vadd.f32 %v718, %v785
          %v787 = vpop.f32.mrf.mxu0
          %788 = vdwg.mxu0
          %v789 = vmul.f32 %v786, %v786
          %vm790 = vcmask 1040384
          %v791 = vsel %vm790, %v789, 0.0
          %792 = vadd.xlane.f32.xlu0 %v791
          %v793 = vpop.xlane.xlu0 %792
          %v794 = vmax.f32 %v793, 1e-24
          %v795 = vrsqrt.pop %v794
          %v796 = vmul.f32 %v786, %v795
          %v797 = vld [vmem:[%s5] sm:$0xff]
          %v798 = vld [vmem:[%s5 + $0x8] sm:$0xff]
          %v799 = vld [vmem:[%s5 + $0x10] sm:$0xff]
          %v800 = vld [vmem:[%s5 + $0x18] sm:$0xff]
          %v801 = vld [vmem:[%s5 + $0x20] sm:$0xff]
          %v802 = vld [vmem:[%s5 + $0x28] sm:$0xff]
          %v803 = vld [vmem:[%s5 + $0x30] sm:$0xff]
          %v804 = vld [vmem:[%s5 + $0x38] sm:$0xff]
          %v805 = vld [vmem:[%s5 + $0x40] sm:$0xff]
          %v806 = vld [vmem:[%s5 + $0x48] sm:$0xff]
          %v807 = vld [vmem:[%s5 + $0x50] sm:$0xff]
          %v808 = vld [vmem:[%s5 + $0x58] sm:$0xff]
          %v809 = vld [vmem:[%s5 + $0x60] sm:$0xff]
          %v810 = vld [vmem:[%s5 + $0x68] sm:$0xff]
          %v811 = vld [vmem:[%s5 + $0x70] sm:$0xff]
          %v812 = vld [vmem:[%s5 + $0x78] sm:$0xff]
          %813 = vmatprep.subr.mxu0 0.0
          %814 = vmatpush1.msra.mxu0 %v812
          %815 = vmatprep.subr.mxu0 0.0
          %816 = vmatpush1.msra.mxu0 %v811
          %817 = vmatprep.subr.mxu0 0.0
          %818 = vmatpush1.msra.mxu0 %v810
          %819 = vmatprep.subr.mxu0 0.0
          %820 = vmatpush1.msra.mxu0 %v809
          %821 = vmatprep.subr.mxu0 0.0
          %822 = vmatpush1.msra.mxu0 %v808
          %823 = vmatprep.subr.mxu0 0.0
          %824 = vmatpush1.msra.mxu0 %v807
          %825 = vmatprep.subr.mxu0 0.0
          %826 = vmatpush1.msra.mxu0 %v806
          %827 = vmatprep.subr.mxu0 0.0
          %828 = vmatpush1.msra.mxu0 %v805
          %829 = vmatprep.subr.mxu0 0.0
          %830 = vmatpush1.msra.mxu0 %v804
          %831 = vmatprep.subr.mxu0 0.0
          %832 = vmatpush1.msra.mxu0 %v803
          %833 = vmatprep.subr.mxu0 0.0
          %834 = vmatpush1.msra.mxu0 %v802
          %835 = vmatprep.subr.mxu0 0.0
          %836 = vmatpush1.msra.mxu0 %v801
          %837 = vmatprep.subr.mxu0 0.0
          %838 = vmatpush1.msra.mxu0 %v800
          %839 = vmatprep.subr.mxu0 0.0
          %840 = vmatpush1.msra.mxu0 %v799
          %841 = vmatprep.subr.mxu0 0.0
          %842 = vmatpush1.msra.mxu0 %v798
          %843 = vmatprep.subr.mxu0 0.0
          %844 = vmatpush1.msra.mxu0 %v797
          %845 = vmatprep.subr.mxu0 0.0
          %846 = vmatpush2.msra.mxu0 0.0
          %847 = vmatprep.subr.mxu0 0.0
          %848 = vmatpush2.msra.mxu0 0.0
          %849 = vmatprep.subr.mxu0 0.0
          %850 = vmatpush2.msra.mxu0 0.0
          %851 = vmatprep.subr.mxu0 0.0
          %852 = vmatpush2.msra.mxu0 0.0
          %853 = vmatprep.subr.mxu0 0.0
          %854 = vmatpush2.msra.mxu0 0.0
          %855 = vmatprep.subr.mxu0 0.0
          %856 = vmatpush2.msra.mxu0 0.0
          %857 = vmatprep.subr.mxu0 0.0
          %858 = vmatpush2.msra.mxu0 0.0
          %859 = vmatprep.subr.mxu0 0.0
          %860 = vmatpush2.msra.mxu0 0.0
          %861 = vmatprep.subr.mxu0 0.0
          %862 = vmatpush2.msra.mxu0 0.0
          %863 = vmatprep.subr.mxu0 0.0
          %864 = vmatpush2.msra.mxu0 0.0
          %865 = vmatprep.subr.mxu0 0.0
          %866 = vmatpush2.msra.mxu0 0.0
          %867 = vmatprep.subr.mxu0 0.0
          %868 = vmatpush2.msra.mxu0 0.0
          %869 = vmatprep.subr.mxu0 0.0
          %870 = vmatpush2.msra.mxu0 0.0
          %871 = vmatprep.subr.mxu0 0.0
          %872 = vmatpush2.msra.mxu0 0.0
          %873 = vmatprep.subr.mxu0 0.0
          %874 = vmatpush2.msra.mxu0 0.0
          %875 = vmatprep.subr.mxu0 0.0
          %876 = vmatpush2.msra.mxu0 0.0
          %877 = vmatprep.mubr.f32.mxu0 0.0
          %878 = vmatmul.mubr.f32.gmra.mxu0 %v796
          %v879 = vpop.f32.mrf.mxu0
          %v880 = vadd.f32 0.0, %v879
          %v881 = vpop.f32.mrf.mxu0
          %882 = vdwg.mxu0
          %v883 = vmul.f32 %v880, 30.0
          %884 = vst [vmem:[%s265] sm:$0x1] %v883
        $region52: #{monkey_recognition_forward.1} parent=43 // pred_fallthru
          _
        %s885 = sand.u32 %s173, 1
        %s886 = scalar_lea.sflag [#allocation4], %s885
        %s887 = sand.u32 %s173, 1
        %s888 = scalar_lea.vmem [#allocation3], %s887
        // Predicated region
        $region53: #{monkey_recognition_forward.1} parent=43 // pred_check
          %p889 = pneg %p183
        $region54: #{monkey_recognition_forward.1} parent=43 // pred_check_branch
          %891 = sbr.rel (%p889) target = $region56
        $region55: #{monkey_recognition_forward.1} parent=43 // pred_region
          %s893 = ssub.s32 16, 16
          %894 = vsyncadd %s886, %s893
          %s895 = smul.addr %s24, 16
          %s896 = scalar_lea.hbm %s6, %s895
          %s898 = sshll.u32 %s888, 4
          %s899 = int_to_ptr.vmem [resolvable:$true] %s898
          %901 = dma.vmem_to_hbm [thread:$0]  %s899, 16, %s896, %s886
        $region56: #{monkey_recognition_forward.1} parent=43 // pred_fallthru
          _
      $region44: #{monkey_recognition_forward.1} parent=5 // pred_fallthru
        _
      %p902 = scmp.le.s32.totalorder 2, %s15
      // Predicated region
      $region57: #{monkey_recognition_forward.1} parent=5 // pred_check
        %p903 = pneg %p902
      $region58: #{monkey_recognition_forward.1} parent=5 // pred_check_branch
        %905 = sbr.rel (%p903) target = $region60
      $region59: #{monkey_recognition_forward.1} parent=5 // pred_region
        %s906 = ssub.s32 %s15, 2
        // Predicated region
        $region61: #{monkey_recognition_forward.1} parent=59 // pred_check
          %p907 = pneg %p189
        $region62: #{monkey_recognition_forward.1} parent=59 // pred_check_branch
          %909 = sbr.rel (%p907) target = $region64
        $region63: #{monkey_recognition_forward.1} parent=59 // pred_region
          %s910 = sand.u32 %s174, 1
          %s911 = scalar_lea.sflag [#allocation4], %s910
          %s912 = sand.u32 %s174, 1
          %s913 = scalar_lea.vmem [#allocation3], %s912
          %914 = dma.done %s911, 16
        $region64: #{monkey_recognition_forward.1} parent=59 // pred_fallthru
          _
      $region60: #{monkey_recognition_forward.1} parent=5 // pred_fallthru
        _
    $region6: #{monkey_recognition_forward.1} parent=1 // loop_footer
      %s19 = sadd.s32 1, %s15
    $region7: #{monkey_recognition_forward.1} parent=1 // loop_footer_branch
      %14 = sbr.rel target = $region3
    $region8: #{monkey_recognition_forward.1} parent=1 // loop_exit
      _
    %915 = vsyncpa [#allocation4], 1
    %s916 = scalar_lea.sflag [#allocation4], 1
    %917 = vsyncpa %s916, 1

</llo_original>
